<compile_context>
chip_gen: v7x
topology: tpu7x:2x2x1
jax: 0.10.0
libtpu: 0.0.40
codegen_flags: <defaults>
</compile_context>

<pallas_src>
import functools

import numpy as np
import jax
import jax.numpy as jnp
from jax.experimental import pallas as pl
from jax.experimental.pallas import tpu as pltpu


# ----------------------------------------------------------------------------
# Fused kernel: the whole Block for one batch element.
#
# refs = (x,
#         dw_0, W_0, b_0, ..., dw_{n-1}, W_{n-1}, b_{n-1},   # n = R layers
#         W_r, b_r, band_w,                                  # residual branch
#         out)
# ----------------------------------------------------------------------------
def _block_kernel(*refs, n_layers, k, n_band, mxu_dtype):
    x_ref, o_ref = refs[0], refs[-1]
    prm = refs[1:-1]
    layer_prm = [prm[3 * i:3 * i + 3] for i in range(n_layers)]
    wr_ref, br_ref, bw_ref = prm[3 * n_layers:3 * n_layers + 3]

    f32 = jnp.float32
    x = x_ref[...].astype(f32)                                   # (C_in, L_pad)
    l_pad = x.shape[-1]

    def shift_left(a, t):
        # a'[:, i] = a[:, (i + t) % L_pad] -- XLU lane rotate (free slot while
        # the VPU does the MACs).  Wrapped tail lanes are never read by lanes
        # that survive the final crop.
        if t == 0:
            return a
        return pltpu.roll(a, l_pad - t, axis=1)

    # ---- Residual branch: banded AdaptiveAvgPool1d applied BEFORE the folded
    # pointwise-conv+BN.  band_w[d, i] is the pool weight of input lane (i+d)
    # for output lane i; it is zero for i >= L_f, so padded/garbage lanes
    # contribute nothing.  O(L) work, no O(L^2) matrix anywhere.
    bw = bw_ref[...]                                             # (n_band, L_pad)
    xp = x * bw[0:1, :]
    for d in range(1, n_band):
        xp = xp + shift_left(x, d) * bw[d:d + 1, :]              # (C_in, L_pad)
    res = jnp.dot(wr_ref[...], xp.astype(mxu_dtype),
                  preferred_element_type=f32) + br_ref[...]      # (C_out, L_pad)

    # ---- Main branch: (R-1) SubBlocks + last depthwise block, VMEM resident,
    # constant 128-aligned lane width (VALID-conv invalid tail lanes never feed
    # lanes that survive the crop).
    cur = x
    for i, (dw_ref, w_ref, b_ref) in enumerate(layer_prm):
        dw = dw_ref[...].astype(f32)                             # (C_i, k)
        acc = cur * dw[:, 0:1]
        for t in range(1, k):                                    # k-1 XLU rolls
            acc = acc + shift_left(cur, t) * dw[:, t:t + 1]
        # Folded pointwise conv + biases + eval-BN: one MXU matmul + one add
        # (weights already in mxu_dtype host-side; f32 accumulation).
        y = jnp.dot(w_ref[...], acc.astype(mxu_dtype),
                    preferred_element_type=f32) + b_ref[...]     # (C_out, L_pad)
        if i < n_layers - 1:                                     # SubBlock ReLU
            y = jnp.maximum(y, 0.0)
        cur = y

    # Residual add + final ReLU (Dropout1d is identity in eval mode).
    # Lane-dense store over the full L_pad width; wrapper crops to l_f.
    o_ref[...] = jnp.maximum(cur + res, 0.0).astype(o_ref.dtype)


# ----------------------------------------------------------------------------
# Host-side helpers: pool band construction, BN/bias folding, BlockSpecs.
# ----------------------------------------------------------------------------
def _bcast_spec(shape):
    n = len(shape)

    def idx(b):
        return (0,) * n

    return pl.BlockSpec(shape, idx)


def adaptive_avg_pool_matrix(l_in, l_out):
    """PyTorch AdaptiveAvgPool1d as a static (l_out, l_in) averaging matrix."""
    P = np.zeros((l_out, l_in), np.float32)
    for i in range(l_out):
        s = (i * l_in) // l_out
        e = -((-(i + 1) * l_in) // l_out)            # ceil((i+1)*l_in/l_out)
        P[i, s:e] = 1.0 / (e - s)
    return P


def adaptive_pool_band(l_in, l_out, l_pad):
    """AdaptiveAvgPool1d as a non-negative band: bw[d, i] = P[i, i+d]."""
    P = adaptive_avg_pool_matrix(l_in, l_out)
    max_d, min_d = 0, 0
    for i in range(l_out):
        nz = np.nonzero(P[i])[0]
        min_d = min(min_d, int(nz[0]) - i)
        max_d = max(max_d, int(nz[-1]) - i)
    assert min_d >= 0, "pool band has negative offsets (l_out > l_in?)"
    bw = np.zeros((max_d + 1, l_pad), np.float32)
    for i in range(l_out):
        for j in np.nonzero(P[i])[0]:
            bw[j - i, i] = P[i, j]
    return bw


def fold_dwpw_bn(dw, dwb, pw_t, pwb, bn_scale, bn_shift):
    """Fold pointwise bias, depthwise bias and eval-BN into (dw, W, b)."""
    W = pw_t * bn_scale[:, None]                       # (C_out, C_in)
    b = bn_scale * (pw_t @ dwb + pwb) + bn_shift       # (C_out,)
    return dw, W, b[:, None]


def fold_pw_bn(pw_t, pwb, bn_scale, bn_shift):
    W = pw_t * bn_scale[:, None]
    b = bn_scale * pwb + bn_shift
    return W, b[:, None]


def block_forward(x_ncl, layers_folded, res_folded, *, k, mxu_dtype=jnp.bfloat16):
    """Full Block.forward in one pallas_call.

    x_ncl:          (B, C_in, L) -- PyTorch Conv1d layout (no transposes).
    layers_folded:  [(dw (C_i,k), W (C_out,C_i), b (C_out,1)), ...] for the
                    R-1 SubBlocks followed by the last depthwise block.
    res_folded:     (W_r (C_out,C_in), b_r (C_out,1)) for the residual branch.
    mxu_dtype:      dtype fed to the MXU (bf16 default: bf16-native on
                    v5e/v6e/v7x); accumulation stays f32.
    """
    B, c_in, L = x_ncl.shape
    n_layers = len(layers_folded)
    c_out = layers_folded[-1][1].shape[0]
    l_f = L - n_layers * (k - 1)
    assert l_f > 0, "input too short for R VALID depthwise convolutions"

    # Constant, 128-aligned lane width for every layer and a lane-dense store.
    l_pad = max(128, -(-L // 128) * 128)
    x_pad = jnp.pad(x_ncl, ((0, 0), (0, 0), (0, l_pad - L))) if l_pad > L else x_ncl

    w_r, b_r = res_folded
    bw = jnp.asarray(adaptive_pool_band(L, l_f, l_pad))          # (n_band, L_pad)
    n_band = bw.shape[0]

    # MXU-fed weights cast host-side; VPU-side params (dw, biases, band) stay f32.
    params = []
    in_specs = [pl.BlockSpec((None, c_in, l_pad), lambda b: (b, 0, 0))]
    for dw, w, bias in layers_folded:
        for p in (dw, w.astype(mxu_dtype), bias):
            params.append(p)
            in_specs.append(_bcast_spec(p.shape))
    for p in (w_r.astype(mxu_dtype), b_r, bw):
        params.append(p)
        in_specs.append(_bcast_spec(p.shape))

    # VMEM budget: double-buffered x/out blocks + constant-index weight blocks.
    def _nbytes(a):
        return int(np.prod(a.shape)) * jnp.dtype(a.dtype).itemsize

    block_bytes = (c_in * l_pad * jnp.dtype(x_pad.dtype).itemsize
                   + c_out * l_pad * jnp.dtype(x_ncl.dtype).itemsize
                   + sum(_nbytes(p) for p in params))
    vmem_limit = int(min(128 << 20, max(32 << 20, 4 * block_bytes)))

    kern = functools.partial(_block_kernel, n_layers=n_layers, k=k,
                             n_band=n_band, mxu_dtype=mxu_dtype)
    # TODO(synk): for production L, add an L-tile "parallel" grid axis with an
    # n_layers*(k-1) halo (Element-offset BlockSpec or manual make_async_copy)
    # so the working set fits v7x's 64 MiB VMEM / 64 vregs and both TensorCores
    # get work when B is small.
    out_pad = pl.pallas_call(
        kern,
        out_shape=jax.ShapeDtypeStruct((B, c_out, l_pad), x_ncl.dtype),
        grid=(B,),
        in_specs=in_specs,
        out_specs=pl.BlockSpec((None, c_out, l_pad), lambda b: (b, 0, 0)),
        compiler_params=pltpu.CompilerParams(
            dimension_semantics=("parallel",),
            vmem_limit_bytes=vmem_limit),
    )(x_pad, *params)
    return out_pad[:, :, :l_f]                                   # crop lane pad


# ----------------------------------------------------------------------------
# Pure-JAX reference mirroring the PyTorch module op-by-op (for correctness)
# ----------------------------------------------------------------------------
def ref_forward(x_ncl, raw_subs, raw_last, raw_res, k):
    def dwconv(x, dw, dwb):                            # dw (C,k), dwb (C,)
        C = x.shape[1]
        y = jax.lax.conv_general_dilated(
            x, dw[:, None, :], (1,), 'VALID', feature_group_count=C,
            dimension_numbers=('NCH', 'OIH', 'NCH'))
        return y + dwb[None, :, None]

    def pwconv(x, pw_t, pwb):                          # pw_t (Cout,Cin)
        y = jax.lax.conv_general_dilated(
            x, pw_t[:, :, None], (1,), 'VALID',
            dimension_numbers=('NCH', 'OIH', 'NCH'))
        return y + pwb[None, :, None]

    def bn(x, sc, sh):
        return x * sc[None, :, None] + sh[None, :, None]

    x0, x = x_ncl, x_ncl
    for (dw, dwb, pw_t, pwb, sc, sh) in raw_subs:
        x = jnp.maximum(bn(pwconv(dwconv(x, dw, dwb), pw_t, pwb), sc, sh), 0.0)
    dw, dwb, pw_t, pwb, sc, sh = raw_last
    x = bn(pwconv(dwconv(x, dw, dwb), pw_t, pwb), sc, sh)
    rpw_t, rpwb, rsc, rsh = raw_res
    r = bn(pwconv(x0, rpw_t, rpwb), rsc, rsh)
    P = jnp.asarray(adaptive_avg_pool_matrix(r.shape[2], x.shape[2]))
    r = jnp.einsum('ol,bcl->bco', P, r)
    return jnp.maximum(x + r, 0.0)


# ----------------------------------------------------------------------------
# Main
# ----------------------------------------------------------------------------
if __name__ == "__main__":
    R, C_IN, C_OUT, K = 3, 4, 8, 3
    B, L = 2, 16

    keys = iter(jax.random.split(jax.random.PRNGKey(0), 64))

    def u(shape, lo, hi):
        return jax.random.uniform(next(keys), shape, jnp.float32, lo, hi)

    def make_dwpw(cin, cout, kk):
        bd, bp = 1.0 / np.sqrt(kk), 1.0 / np.sqrt(cin)
        return (u((cin, kk), -bd, bd), u((cin,), -bd, bd),
                u((cout, cin), -bp, bp), u((cout,), -bp, bp))

    def make_bn(c):
        # eval-mode BatchNorm1d == per-channel affine (scale, shift)
        return u((c,), 0.5, 1.5), u((c,), -0.5, 0.5)

    raw_subs = []
    cin_cur = C_IN
    for _ in range(R - 1):
        raw_subs.append(make_dwpw(cin_cur, C_OUT, K) + make_bn(C_OUT))
        cin_cur = C_OUT
    raw_last = make_dwpw(cin_cur, C_OUT, K) + make_bn(C_OUT)
    raw_res = (u((C_OUT, C_IN), -0.5, 0.5), u((C_OUT,), -0.5, 0.5)) + make_bn(C_OUT)

    layers_folded = [fold_dwpw_bn(*p) for p in raw_subs] + [fold_dwpw_bn(*raw_last)]
    res_folded = fold_pw_bn(*raw_res)

    x = jax.random.normal(next(keys), (B, C_IN, L), jnp.float32)   # PyTorch NCL

    ref = jax.block_until_ready(ref_forward(x, raw_subs, raw_last, raw_res, K))

    # f32 MXU operands: tight check of the fused / BN-folded / banded-pool kernel.
    out = jax.block_until_ready(
        block_forward(x, layers_folded, res_folded, k=K, mxu_dtype=jnp.float32))
    np.testing.assert_allclose(np.asarray(out), np.asarray(ref),
                               rtol=1e-4, atol=1e-4)

    # bf16 MXU operands (production default on v5e/v6e/v7x; f32 accumulation).
    out_bf16 = jax.block_until_ready(
        block_forward(x, layers_folded, res_folded, k=K, mxu_dtype=jnp.bfloat16))
    np.testing.assert_allclose(np.asarray(out_bf16), np.asarray(ref),
                               rtol=5e-2, atol=5e-2)

    print("KERNEL_OK")
</pallas_src>

<mosaic_0001>
module attributes {stable_mosaic.version = 11 : i64} {
  func.func @_block_kernel(%arg0: i32, %arg1: memref<1x4x128xf32, #tpu.memory_space<vmem>>, %arg2: memref<4x3xf32, #tpu.memory_space<vmem>>, %arg3: memref<8x4xf32, #tpu.memory_space<vmem>>, %arg4: memref<8x1xf32, #tpu.memory_space<vmem>>, %arg5: memref<8x3xf32, #tpu.memory_space<vmem>>, %arg6: memref<8x8xf32, #tpu.memory_space<vmem>>, %arg7: memref<8x1xf32, #tpu.memory_space<vmem>>, %arg8: memref<8x3xf32, #tpu.memory_space<vmem>>, %arg9: memref<8x8xf32, #tpu.memory_space<vmem>>, %arg10: memref<8x1xf32, #tpu.memory_space<vmem>>, %arg11: memref<8x4xf32, #tpu.memory_space<vmem>>, %arg12: memref<8x1xf32, #tpu.memory_space<vmem>>, %arg13: memref<7x128xf32, #tpu.memory_space<vmem>>, %arg14: memref<1x8x128xf32, #tpu.memory_space<vmem>>) attributes {dimension_semantics = [#tpu.dimension_semantics<parallel>], iteration_bounds = array<i64: 2>, scalar_prefetch = 0 : i64, scratch_operands = 0 : i64, tpu.core_type = #tpu.core_type<tc>, window_params = [{transform_indices = @transform_0, window_bounds = array<i64: 1, 4, 128>}, {pipeline_mode = #tpu.pipeline_mode<synchronous>, transform_indices = @transform_1, window_bounds = array<i64: 4, 3>}, {pipeline_mode = #tpu.pipeline_mode<synchronous>, transform_indices = @transform_2, window_bounds = array<i64: 8, 4>}, {pipeline_mode = #tpu.pipeline_mode<synchronous>, transform_indices = @transform_3, window_bounds = array<i64: 8, 1>}, {pipeline_mode = #tpu.pipeline_mode<synchronous>, transform_indices = @transform_4, window_bounds = array<i64: 8, 3>}, {pipeline_mode = #tpu.pipeline_mode<synchronous>, transform_indices = @transform_5, window_bounds = array<i64: 8, 8>}, {pipeline_mode = #tpu.pipeline_mode<synchronous>, transform_indices = @transform_6, window_bounds = array<i64: 8, 1>}, {pipeline_mode = #tpu.pipeline_mode<synchronous>, transform_indices = @transform_7, window_bounds = array<i64: 8, 3>}, {pipeline_mode = #tpu.pipeline_mode<synchronous>, transform_indices = @transform_8, window_bounds = array<i64: 8, 8>}, {pipeline_mode = #tpu.pipeline_mode<synchronous>, transform_indices = @transform_9, window_bounds = array<i64: 8, 1>}, {pipeline_mode = #tpu.pipeline_mode<synchronous>, transform_indices = @transform_10, window_bounds = array<i64: 8, 4>}, {pipeline_mode = #tpu.pipeline_mode<synchronous>, transform_indices = @transform_11, window_bounds = array<i64: 8, 1>}, {pipeline_mode = #tpu.pipeline_mode<synchronous>, transform_indices = @transform_12, window_bounds = array<i64: 7, 128>}, {transform_indices = @transform_13, window_bounds = array<i64: 1, 8, 128>}]} {
    %c0 = arith.constant 0 : index
    %c0_0 = arith.constant 0 : index
    %c0_1 = arith.constant 0 : index
    %0 = vector.load %arg1[%c0, %c0_0, %c0_1] : memref<1x4x128xf32, #tpu.memory_space<vmem>>, vector<1x4x128xf32>
    %1 = vector.shape_cast %0 : vector<1x4x128xf32> to vector<4x128xf32>
    %c0_2 = arith.constant 0 : index
    %c0_3 = arith.constant 0 : index
    %2 = vector.load %arg13[%c0_2, %c0_3] : memref<7x128xf32, #tpu.memory_space<vmem>>, vector<7x128xf32>
    %3 = vector.extract_strided_slice %2 {offsets = [0, 0], sizes = [1, 128], strides = [1, 1]} : vector<7x128xf32> to vector<1x128xf32>
    %4 = vector.broadcast %3 : vector<1x128xf32> to vector<4x128xf32>
    %5 = arith.mulf %1, %4 : vector<4x128xf32>
    %c127_i32 = arith.constant 127 : i32
    %6 = tpu.dynamic_rotate %1 by %c127_i32 dim 1 : vector<4x128xf32>, i32 -> vector<4x128xf32>
    %7 = vector.extract_strided_slice %2 {offsets = [1, 0], sizes = [1, 128], strides = [1, 1]} : vector<7x128xf32> to vector<1x128xf32>
    %8 = vector.broadcast %7 : vector<1x128xf32> to vector<4x128xf32>
    %9 = arith.mulf %6, %8 : vector<4x128xf32>
    %10 = arith.addf %5, %9 : vector<4x128xf32>
    %c126_i32 = arith.constant 126 : i32
    %11 = tpu.dynamic_rotate %1 by %c126_i32 dim 1 : vector<4x128xf32>, i32 -> vector<4x128xf32>
    %12 = vector.extract_strided_slice %2 {offsets = [2, 0], sizes = [1, 128], strides = [1, 1]} : vector<7x128xf32> to vector<1x128xf32>
    %13 = vector.broadcast %12 : vector<1x128xf32> to vector<4x128xf32>
    %14 = arith.mulf %11, %13 : vector<4x128xf32>
    %15 = arith.addf %10, %14 : vector<4x128xf32>
    %c125_i32 = arith.constant 125 : i32
    %16 = tpu.dynamic_rotate %1 by %c125_i32 dim 1 : vector<4x128xf32>, i32 -> vector<4x128xf32>
    %17 = vector.extract_strided_slice %2 {offsets = [3, 0], sizes = [1, 128], strides = [1, 1]} : vector<7x128xf32> to vector<1x128xf32>
    %18 = vector.broadcast %17 : vector<1x128xf32> to vector<4x128xf32>
    %19 = arith.mulf %16, %18 : vector<4x128xf32>
    %20 = arith.addf %15, %19 : vector<4x128xf32>
    %c124_i32 = arith.constant 124 : i32
    %21 = tpu.dynamic_rotate %1 by %c124_i32 dim 1 : vector<4x128xf32>, i32 -> vector<4x128xf32>
    %22 = vector.extract_strided_slice %2 {offsets = [4, 0], sizes = [1, 128], strides = [1, 1]} : vector<7x128xf32> to vector<1x128xf32>
    %23 = vector.broadcast %22 : vector<1x128xf32> to vector<4x128xf32>
    %24 = arith.mulf %21, %23 : vector<4x128xf32>
    %25 = arith.addf %20, %24 : vector<4x128xf32>
    %c123_i32 = arith.constant 123 : i32
    %26 = tpu.dynamic_rotate %1 by %c123_i32 dim 1 : vector<4x128xf32>, i32 -> vector<4x128xf32>
    %27 = vector.extract_strided_slice %2 {offsets = [5, 0], sizes = [1, 128], strides = [1, 1]} : vector<7x128xf32> to vector<1x128xf32>
    %28 = vector.broadcast %27 : vector<1x128xf32> to vector<4x128xf32>
    %29 = arith.mulf %26, %28 : vector<4x128xf32>
    %30 = arith.addf %25, %29 : vector<4x128xf32>
    %c122_i32 = arith.constant 122 : i32
    %31 = tpu.dynamic_rotate %1 by %c122_i32 dim 1 : vector<4x128xf32>, i32 -> vector<4x128xf32>
    %32 = vector.extract_strided_slice %2 {offsets = [6, 0], sizes = [1, 128], strides = [1, 1]} : vector<7x128xf32> to vector<1x128xf32>
    %33 = vector.broadcast %32 : vector<1x128xf32> to vector<4x128xf32>
    %34 = arith.mulf %31, %33 : vector<4x128xf32>
    %35 = arith.addf %30, %34 : vector<4x128xf32>
    %c0_4 = arith.constant 0 : index
    %c0_5 = arith.constant 0 : index
    %36 = vector.load %arg11[%c0_4, %c0_5] : memref<8x4xf32, #tpu.memory_space<vmem>>, vector<8x4xf32>
    %cst = arith.constant dense<0.000000e+00> : vector<8x128xf32>
    %37 = tpu.matmul %36, %35, %cst {dimension_numbers = #tpu.dot_dimension_numbers<[1], [0], [0], [1], [0, 0, 1, 1], [], []>} : vector<8x4xf32>, vector<4x128xf32>, vector<8x128xf32> -> vector<8x128xf32>
    %c0_6 = arith.constant 0 : index
    %c0_7 = arith.constant 0 : index
    %38 = vector.load %arg12[%c0_6, %c0_7] : memref<8x1xf32, #tpu.memory_space<vmem>>, vector<8x1xf32>
    %39 = vector.broadcast %38 : vector<8x1xf32> to vector<8x128xf32>
    %40 = arith.addf %37, %39 : vector<8x128xf32>
    %c0_8 = arith.constant 0 : index
    %c0_9 = arith.constant 0 : index
    %41 = vector.load %arg2[%c0_8, %c0_9] : memref<4x3xf32, #tpu.memory_space<vmem>>, vector<4x3xf32>
    %42 = vector.extract_strided_slice %41 {offsets = [0, 0], sizes = [4, 1], strides = [1, 1]} : vector<4x3xf32> to vector<4x1xf32>
    %43 = vector.broadcast %42 : vector<4x1xf32> to vector<4x128xf32>
    %44 = arith.mulf %1, %43 : vector<4x128xf32>
    %c127_i32_10 = arith.constant 127 : i32
    %45 = tpu.dynamic_rotate %1 by %c127_i32_10 dim 1 : vector<4x128xf32>, i32 -> vector<4x128xf32>
    %46 = vector.extract_strided_slice %41 {offsets = [0, 1], sizes = [4, 1], strides = [1, 1]} : vector<4x3xf32> to vector<4x1xf32>
    %47 = vector.broadcast %46 : vector<4x1xf32> to vector<4x128xf32>
    %48 = arith.mulf %45, %47 : vector<4x128xf32>
    %49 = arith.addf %44, %48 : vector<4x128xf32>
    %c126_i32_11 = arith.constant 126 : i32
    %50 = tpu.dynamic_rotate %1 by %c126_i32_11 dim 1 : vector<4x128xf32>, i32 -> vector<4x128xf32>
    %51 = vector.extract_strided_slice %41 {offsets = [0, 2], sizes = [4, 1], strides = [1, 1]} : vector<4x3xf32> to vector<4x1xf32>
    %52 = vector.broadcast %51 : vector<4x1xf32> to vector<4x128xf32>
    %53 = arith.mulf %50, %52 : vector<4x128xf32>
    %54 = arith.addf %49, %53 : vector<4x128xf32>
    %c0_12 = arith.constant 0 : index
    %c0_13 = arith.constant 0 : index
    %55 = vector.load %arg3[%c0_12, %c0_13] : memref<8x4xf32, #tpu.memory_space<vmem>>, vector<8x4xf32>
    %cst_14 = arith.constant dense<0.000000e+00> : vector<8x128xf32>
    %56 = tpu.matmul %55, %54, %cst_14 {dimension_numbers = #tpu.dot_dimension_numbers<[1], [0], [0], [1], [0, 0, 1, 1], [], []>} : vector<8x4xf32>, vector<4x128xf32>, vector<8x128xf32> -> vector<8x128xf32>
    %c0_15 = arith.constant 0 : index
    %c0_16 = arith.constant 0 : index
    %57 = vector.load %arg4[%c0_15, %c0_16] : memref<8x1xf32, #tpu.memory_space<vmem>>, vector<8x1xf32>
    %58 = vector.broadcast %57 : vector<8x1xf32> to vector<8x128xf32>
    %59 = arith.addf %56, %58 : vector<8x128xf32>
    %cst_17 = arith.constant 0.000000e+00 : f32
    %60 = vector.broadcast %cst_17 : f32 to vector<8x128xf32>
    %61 = arith.maximumf %59, %60 : vector<8x128xf32>
    %c0_18 = arith.constant 0 : index
    %c0_19 = arith.constant 0 : index
    %62 = vector.load %arg5[%c0_18, %c0_19] : memref<8x3xf32, #tpu.memory_space<vmem>>, vector<8x3xf32>
    %63 = vector.extract_strided_slice %62 {offsets = [0, 0], sizes = [8, 1], strides = [1, 1]} : vector<8x3xf32> to vector<8x1xf32>
    %64 = vector.broadcast %63 : vector<8x1xf32> to vector<8x128xf32>
    %65 = arith.mulf %61, %64 : vector<8x128xf32>
    %c127_i32_20 = arith.constant 127 : i32
    %66 = tpu.dynamic_rotate %61 by %c127_i32_20 dim 1 : vector<8x128xf32>, i32 -> vector<8x128xf32>
    %67 = vector.extract_strided_slice %62 {offsets = [0, 1], sizes = [8, 1], strides = [1, 1]} : vector<8x3xf32> to vector<8x1xf32>
    %68 = vector.broadcast %67 : vector<8x1xf32> to vector<8x128xf32>
    %69 = arith.mulf %66, %68 : vector<8x128xf32>
    %70 = arith.addf %65, %69 : vector<8x128xf32>
    %c126_i32_21 = arith.constant 126 : i32
    %71 = tpu.dynamic_rotate %61 by %c126_i32_21 dim 1 : vector<8x128xf32>, i32 -> vector<8x128xf32>
    %72 = vector.extract_strided_slice %62 {offsets = [0, 2], sizes = [8, 1], strides = [1, 1]} : vector<8x3xf32> to vector<8x1xf32>
    %73 = vector.broadcast %72 : vector<8x1xf32> to vector<8x128xf32>
    %74 = arith.mulf %71, %73 : vector<8x128xf32>
    %75 = arith.addf %70, %74 : vector<8x128xf32>
    %c0_22 = arith.constant 0 : index
    %c0_23 = arith.constant 0 : index
    %76 = vector.load %arg6[%c0_22, %c0_23] : memref<8x8xf32, #tpu.memory_space<vmem>>, vector<8x8xf32>
    %cst_24 = arith.constant dense<0.000000e+00> : vector<8x128xf32>
    %77 = tpu.matmul %76, %75, %cst_24 {dimension_numbers = #tpu.dot_dimension_numbers<[1], [0], [0], [1], [0, 0, 1, 1], [], []>} : vector<8x8xf32>, vector<8x128xf32>, vector<8x128xf32> -> vector<8x128xf32>
    %c0_25 = arith.constant 0 : index
    %c0_26 = arith.constant 0 : index
    %78 = vector.load %arg7[%c0_25, %c0_26] : memref<8x1xf32, #tpu.memory_space<vmem>>, vector<8x1xf32>
    %79 = vector.broadcast %78 : vector<8x1xf32> to vector<8x128xf32>
    %80 = arith.addf %77, %79 : vector<8x128xf32>
    %cst_27 = arith.constant 0.000000e+00 : f32
    %81 = vector.broadcast %cst_27 : f32 to vector<8x128xf32>
    %82 = arith.maximumf %80, %81 : vector<8x128xf32>
    %c0_28 = arith.constant 0 : index
    %c0_29 = arith.constant 0 : index
    %83 = vector.load %arg8[%c0_28, %c0_29] : memref<8x3xf32, #tpu.memory_space<vmem>>, vector<8x3xf32>
    %84 = vector.extract_strided_slice %83 {offsets = [0, 0], sizes = [8, 1], strides = [1, 1]} : vector<8x3xf32> to vector<8x1xf32>
    %85 = vector.broadcast %84 : vector<8x1xf32> to vector<8x128xf32>
    %86 = arith.mulf %82, %85 : vector<8x128xf32>
    %c127_i32_30 = arith.constant 127 : i32
    %87 = tpu.dynamic_rotate %82 by %c127_i32_30 dim 1 : vector<8x128xf32>, i32 -> vector<8x128xf32>
    %88 = vector.extract_strided_slice %83 {offsets = [0, 1], sizes = [8, 1], strides = [1, 1]} : vector<8x3xf32> to vector<8x1xf32>
    %89 = vector.broadcast %88 : vector<8x1xf32> to vector<8x128xf32>
    %90 = arith.mulf %87, %89 : vector<8x128xf32>
    %91 = arith.addf %86, %90 : vector<8x128xf32>
    %c126_i32_31 = arith.constant 126 : i32
    %92 = tpu.dynamic_rotate %82 by %c126_i32_31 dim 1 : vector<8x128xf32>, i32 -> vector<8x128xf32>
    %93 = vector.extract_strided_slice %83 {offsets = [0, 2], sizes = [8, 1], strides = [1, 1]} : vector<8x3xf32> to vector<8x1xf32>
    %94 = vector.broadcast %93 : vector<8x1xf32> to vector<8x128xf32>
    %95 = arith.mulf %92, %94 : vector<8x128xf32>
    %96 = arith.addf %91, %95 : vector<8x128xf32>
    %c0_32 = arith.constant 0 : index
    %c0_33 = arith.constant 0 : index
    %97 = vector.load %arg9[%c0_32, %c0_33] : memref<8x8xf32, #tpu.memory_space<vmem>>, vector<8x8xf32>
    %cst_34 = arith.constant dense<0.000000e+00> : vector<8x128xf32>
    %98 = tpu.matmul %97, %96, %cst_34 {dimension_numbers = #tpu.dot_dimension_numbers<[1], [0], [0], [1], [0, 0, 1, 1], [], []>} : vector<8x8xf32>, vector<8x128xf32>, vector<8x128xf32> -> vector<8x128xf32>
    %c0_35 = arith.constant 0 : index
    %c0_36 = arith.constant 0 : index
    %99 = vector.load %arg10[%c0_35, %c0_36] : memref<8x1xf32, #tpu.memory_space<vmem>>, vector<8x1xf32>
    %100 = vector.broadcast %99 : vector<8x1xf32> to vector<8x128xf32>
    %101 = arith.addf %98, %100 : vector<8x128xf32>
    %102 = arith.addf %101, %40 : vector<8x128xf32>
    %cst_37 = arith.constant 0.000000e+00 : f32
    %103 = vector.broadcast %cst_37 : f32 to vector<8x128xf32>
    %104 = arith.maximumf %102, %103 : vector<8x128xf32>
    %c0_38 = arith.constant 0 : index
    %c0_39 = arith.constant 0 : index
    %c0_40 = arith.constant 0 : index
    %105 = vector.load %arg14[%c0_38, %c0_39, %c0_40] : memref<1x8x128xf32, #tpu.memory_space<vmem>>, vector<1x8x128xf32>
    %106 = vector.shape_cast %105 : vector<1x8x128xf32> to vector<8x128xf32>
    %107 = vector.shape_cast %104 : vector<8x128xf32> to vector<1x8x128xf32>
    tpu.vector_store %arg14[%c0_38, %c0_39, %c0_40], %107 {strides = array<i32>} : memref<1x8x128xf32, #tpu.memory_space<vmem>>, vector<1x8x128xf32>,
    return
  }
  func.func @transform_0(%arg0: i32) -> (i32, i32, i32) {
    %c0_i32 = arith.constant 0 : i32
    %c0_i32_0 = arith.constant 0 : i32
    %c0_i32_1 = arith.constant 0 : i32
    return %arg0, %c0_i32, %c0_i32_0 : i32, i32, i32
  }
  func.func @transform_1(%arg0: i32) -> (i32, i32) {
    %c0_i32 = arith.constant 0 : i32
    %c0_i32_0 = arith.constant 0 : i32
    %c0_i32_1 = arith.constant 0 : i32
    return %c0_i32, %c0_i32_0 : i32, i32
  }
  func.func @transform_2(%arg0: i32) -> (i32, i32) {
    %c0_i32 = arith.constant 0 : i32
    %c0_i32_0 = arith.constant 0 : i32
    %c0_i32_1 = arith.constant 0 : i32
    return %c0_i32, %c0_i32_0 : i32, i32
  }
  func.func @transform_3(%arg0: i32) -> (i32, i32) {
    %c0_i32 = arith.constant 0 : i32
    %c0_i32_0 = arith.constant 0 : i32
    %c0_i32_1 = arith.constant 0 : i32
    return %c0_i32, %c0_i32_0 : i32, i32
  }
  func.func @transform_4(%arg0: i32) -> (i32, i32) {
    %c0_i32 = arith.constant 0 : i32
    %c0_i32_0 = arith.constant 0 : i32
    %c0_i32_1 = arith.constant 0 : i32
    return %c0_i32, %c0_i32_0 : i32, i32
  }
  func.func @transform_5(%arg0: i32) -> (i32, i32) {
    %c0_i32 = arith.constant 0 : i32
    %c0_i32_0 = arith.constant 0 : i32
    %c0_i32_1 = arith.constant 0 : i32
    return %c0_i32, %c0_i32_0 : i32, i32
  }
  func.func @transform_6(%arg0: i32) -> (i32, i32) {
    %c0_i32 = arith.constant 0 : i32
    %c0_i32_0 = arith.constant 0 : i32
    %c0_i32_1 = arith.constant 0 : i32
    return %c0_i32, %c0_i32_0 : i32, i32
  }
  func.func @transform_7(%arg0: i32) -> (i32, i32) {
    %c0_i32 = arith.constant 0 : i32
    %c0_i32_0 = arith.constant 0 : i32
    %c0_i32_1 = arith.constant 0 : i32
    return %c0_i32, %c0_i32_0 : i32, i32
  }
  func.func @transform_8(%arg0: i32) -> (i32, i32) {
    %c0_i32 = arith.constant 0 : i32
    %c0_i32_0 = arith.constant 0 : i32
    %c0_i32_1 = arith.constant 0 : i32
    return %c0_i32, %c0_i32_0 : i32, i32
  }
  func.func @transform_9(%arg0: i32) -> (i32, i32) {
    %c0_i32 = arith.constant 0 : i32
    %c0_i32_0 = arith.constant 0 : i32
    %c0_i32_1 = arith.constant 0 : i32
    return %c0_i32, %c0_i32_0 : i32, i32
  }
  func.func @transform_10(%arg0: i32) -> (i32, i32) {
    %c0_i32 = arith.constant 0 : i32
    %c0_i32_0 = arith.constant 0 : i32
    %c0_i32_1 = arith.constant 0 : i32
    return %c0_i32, %c0_i32_0 : i32, i32
  }
  func.func @transform_11(%arg0: i32) -> (i32, i32) {
    %c0_i32 = arith.constant 0 : i32
    %c0_i32_0 = arith.constant 0 : i32
    %c0_i32_1 = arith.constant 0 : i32
    return %c0_i32, %c0_i32_0 : i32, i32
  }
  func.func @transform_12(%arg0: i32) -> (i32, i32) {
    %c0_i32 = arith.constant 0 : i32
    %c0_i32_0 = arith.constant 0 : i32
    %c0_i32_1 = arith.constant 0 : i32
    return %c0_i32, %c0_i32_0 : i32, i32
  }
  func.func @transform_13(%arg0: i32) -> (i32, i32, i32) {
    %c0_i32 = arith.constant 0 : i32
    %c0_i32_0 = arith.constant 0 : i32
    %c0_i32_1 = arith.constant 0 : i32
    return %arg0, %c0_i32, %c0_i32_0 : i32, i32, i32
  }
}

</mosaic_0001>

<llo_original>
// kernel: tpu_custom_call.1
$region0: #{tpu_custom_call.1}
  #allocation0 [shape = 'u32[]', space=smem, size = 0x4, offset = 0x4, fixed_abs, tag = 'smem constant byte address 0x4 - core index']
  #allocation1 [shape = 'u32[144,128]{1,0:T(1,128)}', space=vmem, size = 0x12000, scoped, tag = 'internal scratch']
  %s0 = inlined_call_operand.vmem [shape: f32[2,4,128], index: 0, kind: input, shape index: {}]
  %s1 = inlined_call_operand.vmem [shape: f32[4,3], index: 1, kind: input, shape index: {}]
  %s2 = inlined_call_operand.vmem [shape: f32[8,4], index: 2, kind: input, shape index: {}]
  %s3 = inlined_call_operand.vmem [shape: f32[8,1], index: 3, kind: input, shape index: {}]
  %s4 = inlined_call_operand.vmem [shape: f32[8,3], index: 4, kind: input, shape index: {}]
  %s5 = inlined_call_operand.vmem [shape: f32[8,8], index: 5, kind: input, shape index: {}]
  %s6 = inlined_call_operand.vmem [shape: f32[8,1], index: 6, kind: input, shape index: {}]
  %s7 = inlined_call_operand.vmem [shape: f32[8,3], index: 7, kind: input, shape index: {}]
  %s8 = inlined_call_operand.vmem [shape: f32[8,8], index: 8, kind: input, shape index: {}]
  %s9 = inlined_call_operand.vmem [shape: f32[8,1], index: 9, kind: input, shape index: {}]
  %s10 = inlined_call_operand.vmem [shape: f32[8,4], index: 10, kind: input, shape index: {}]
  %s11 = inlined_call_operand.vmem [shape: f32[8,1], index: 11, kind: input, shape index: {}]
  %s12 = inlined_call_operand.vmem [shape: f32[7,128], index: 12, kind: input, shape index: {}]
  %s13 = inlined_call_operand.hbm [shape: f32[2,8,128], index: 13, kind: output, shape index: {}]
  %s14 = sld [smem:[#allocation0]]
  $region85: #{tpu_custom_call.1} parent=0
    _
  %s16 = ssub.s32 1, %s14
  %s17 = scalar_select 0, %s16, %s14
  $region1: #{tpu_custom_call.1} parent=0
    #allocation2 [shape = 'u8[8192]{0}', space=vmem, size = 0x2000, scoped, tag = 'output window, operand 0']
    #allocation3 [shape = 's32[2]{0}', space=sflag, size = 0x8, scoped, tag = 'scoped memory for tpu_custom_call.1']
    %18 = vsyncpa [#allocation3], 0
    %s19 = scalar_lea.sflag [#allocation3], 1
    %20 = vsyncpa %s19, 0
    loop: start=0, step=1, limit=4
    $region2: #{tpu_custom_call.1} parent=1 // loop_pre_header
      _
    $region3: #{tpu_custom_call.1} parent=1 // loop_header
      %s22 = sphi 0, %s26
      %p23 = scmp.ge.s32.totalorder %s22, 4
      %s32 = sphi 0, %s34
      %s35 = sphi 0, %s32
      %s36 = sphi 0, %s35
      %s52 = sphi 0, %s36
      %s56 = sphi 0, %s56
      %s58 = sphi 0, %s56
      %s59 = sphi 0, %s58
      %s73 = sphi 0, %s59
      %s77 = sphi 0, %s77
      %s79 = sphi 0, %s77
      %s80 = sphi 0, %s79
      %s94 = sphi 0, %s80
      %s98 = sphi 0, %s98
      %s100 = sphi 0, %s98
      %s101 = sphi 0, %s100
      %s115 = sphi 0, %s101
      %s119 = sphi 0, %s119
      %s121 = sphi 0, %s119
      %s122 = sphi 0, %s121
      %s136 = sphi 0, %s122
      %s140 = sphi 0, %s140
      %s142 = sphi 0, %s140
      %s143 = sphi 0, %s142
      %s157 = sphi 0, %s143
      %s161 = sphi 0, %s161
      %s163 = sphi 0, %s161
      %s164 = sphi 0, %s163
      %s178 = sphi 0, %s164
      %s182 = sphi 0, %s182
      %s184 = sphi 0, %s182
      %s185 = sphi 0, %s184
      %s199 = sphi 0, %s185
      %s203 = sphi 0, %s203
      %s205 = sphi 0, %s203
      %s206 = sphi 0, %s205
      %s220 = sphi 0, %s206
      %s224 = sphi 0, %s224
      %s226 = sphi 0, %s224
      %s227 = sphi 0, %s226
      %s241 = sphi 0, %s227
      %s245 = sphi 0, %s245
      %s247 = sphi 0, %s245
      %s248 = sphi 0, %s247
      %s262 = sphi 0, %s248
      %s266 = sphi 0, %s266
      %s268 = sphi 0, %s266
      %s269 = sphi 0, %s268
      %s283 = sphi 0, %s269
      %s287 = sphi 0, %s287
      %s289 = sphi 0, %s287
      %s290 = sphi 0, %s289
      %s304 = sphi 0, %s290
      %s310 = sphi 0, %s312
      %s313 = sphi 0, %s310
      %s314 = sphi 0, %s313
      %s330 = sphi 0, %s314
    $region4: #{tpu_custom_call.1} parent=1 // loop_header_branch
      %25 = sbr.rel (%p23) target = $region8
    $region5: #{tpu_custom_call.1} parent=1 // loop_body
      %s27 = ssub.s32 %s22, 1
      %s28 = ssub.s32 %s22, 2
      %s29 = sadd.s32 %s22, 1
      %s30 = ssub.s32 %s22, %s29
      %p31 = scmp.eq.s32.totalorder %s30, 0
      %s33 = sadd.s32 %s32, 1
      %s34 = scalar_select %p31, %s32, %s33
      %p37 = pneg %p31
      %p38 = scmp.eq.s32.totalorder %s22, 1
      %p39 = por %p37, %p38
      %p40 = scmp.ne.s32.totalorder %s32, %s35
      %p41 = scmp.eq.s32.totalorder %s22, 0
      %p42 = por %p40, %p41
      %p43 = scmp.ne.s32.totalorder %s32, %s35
      %p44 = scmp.eq.s32.totalorder %s27, 1
      %p45 = por %p43, %p44
      %p46 = scmp.ne.s32.totalorder %s35, %s36
      %p47 = scmp.eq.s32.totalorder %s27, 0
      %p48 = por %p46, %p47
      %p49 = scmp.ne.s32.totalorder %s35, %s36
      %p50 = scmp.eq.s32.totalorder %s28, 1
      %p51 = por %p49, %p50
      %p53 = scmp.ne.s32.totalorder %s36, %s52
      %p54 = scmp.eq.s32.totalorder %s28, 0
      %p55 = por %p53, %p54
      %s57 = sadd.s32 %s56, 1
      %p60 = scmp.eq.s32.totalorder %s22, 1
      %p61 = scmp.ne.s32.totalorder %s56, %s58
      %p62 = scmp.eq.s32.totalorder %s22, 0
      %p63 = por %p61, %p62
      %p64 = scmp.ne.s32.totalorder %s56, %s58
      %p65 = scmp.eq.s32.totalorder %s27, 1
      %p66 = por %p64, %p65
      %p67 = scmp.ne.s32.totalorder %s58, %s59
      %p68 = scmp.eq.s32.totalorder %s27, 0
      %p69 = por %p67, %p68
      %p70 = scmp.ne.s32.totalorder %s58, %s59
      %p71 = scmp.eq.s32.totalorder %s28, 1
      %p72 = por %p70, %p71
      %p74 = scmp.ne.s32.totalorder %s59, %s73
      %p75 = scmp.eq.s32.totalorder %s28, 0
      %p76 = por %p74, %p75
      %s78 = sadd.s32 %s77, 1
      %p81 = scmp.eq.s32.totalorder %s22, 1
      %p82 = scmp.ne.s32.totalorder %s77, %s79
      %p83 = scmp.eq.s32.totalorder %s22, 0
      %p84 = por %p82, %p83
      %p85 = scmp.ne.s32.totalorder %s77, %s79
      %p86 = scmp.eq.s32.totalorder %s27, 1
      %p87 = por %p85, %p86
      %p88 = scmp.ne.s32.totalorder %s79, %s80
      %p89 = scmp.eq.s32.totalorder %s27, 0
      %p90 = por %p88, %p89
      %p91 = scmp.ne.s32.totalorder %s79, %s80
      %p92 = scmp.eq.s32.totalorder %s28, 1
      %p93 = por %p91, %p92
      %p95 = scmp.ne.s32.totalorder %s80, %s94
      %p96 = scmp.eq.s32.totalorder %s28, 0
      %p97 = por %p95, %p96
      %s99 = sadd.s32 %s98, 1
      %p102 = scmp.eq.s32.totalorder %s22, 1
      %p103 = scmp.ne.s32.totalorder %s98, %s100
      %p104 = scmp.eq.s32.totalorder %s22, 0
      %p105 = por %p103, %p104
      %p106 = scmp.ne.s32.totalorder %s98, %s100
      %p107 = scmp.eq.s32.totalorder %s27, 1
      %p108 = por %p106, %p107
      %p109 = scmp.ne.s32.totalorder %s100, %s101
      %p110 = scmp.eq.s32.totalorder %s27, 0
      %p111 = por %p109, %p110
      %p112 = scmp.ne.s32.totalorder %s100, %s101
      %p113 = scmp.eq.s32.totalorder %s28, 1
      %p114 = por %p112, %p113
      %p116 = scmp.ne.s32.totalorder %s101, %s115
      %p117 = scmp.eq.s32.totalorder %s28, 0
      %p118 = por %p116, %p117
      %s120 = sadd.s32 %s119, 1
      %p123 = scmp.eq.s32.totalorder %s22, 1
      %p124 = scmp.ne.s32.totalorder %s119, %s121
      %p125 = scmp.eq.s32.totalorder %s22, 0
      %p126 = por %p124, %p125
      %p127 = scmp.ne.s32.totalorder %s119, %s121
      %p128 = scmp.eq.s32.totalorder %s27, 1
      %p129 = por %p127, %p128
      %p130 = scmp.ne.s32.totalorder %s121, %s122
      %p131 = scmp.eq.s32.totalorder %s27, 0
      %p132 = por %p130, %p131
      %p133 = scmp.ne.s32.totalorder %s121, %s122
      %p134 = scmp.eq.s32.totalorder %s28, 1
      %p135 = por %p133, %p134
      %p137 = scmp.ne.s32.totalorder %s122, %s136
      %p138 = scmp.eq.s32.totalorder %s28, 0
      %p139 = por %p137, %p138
      %s141 = sadd.s32 %s140, 1
      %p144 = scmp.eq.s32.totalorder %s22, 1
      %p145 = scmp.ne.s32.totalorder %s140, %s142
      %p146 = scmp.eq.s32.totalorder %s22, 0
      %p147 = por %p145, %p146
      %p148 = scmp.ne.s32.totalorder %s140, %s142
      %p149 = scmp.eq.s32.totalorder %s27, 1
      %p150 = por %p148, %p149
      %p151 = scmp.ne.s32.totalorder %s142, %s143
      %p152 = scmp.eq.s32.totalorder %s27, 0
      %p153 = por %p151, %p152
      %p154 = scmp.ne.s32.totalorder %s142, %s143
      %p155 = scmp.eq.s32.totalorder %s28, 1
      %p156 = por %p154, %p155
      %p158 = scmp.ne.s32.totalorder %s143, %s157
      %p159 = scmp.eq.s32.totalorder %s28, 0
      %p160 = por %p158, %p159
      %s162 = sadd.s32 %s161, 1
      %p165 = scmp.eq.s32.totalorder %s22, 1
      %p166 = scmp.ne.s32.totalorder %s161, %s163
      %p167 = scmp.eq.s32.totalorder %s22, 0
      %p168 = por %p166, %p167
      %p169 = scmp.ne.s32.totalorder %s161, %s163
      %p170 = scmp.eq.s32.totalorder %s27, 1
      %p171 = por %p169, %p170
      %p172 = scmp.ne.s32.totalorder %s163, %s164
      %p173 = scmp.eq.s32.totalorder %s27, 0
      %p174 = por %p172, %p173
      %p175 = scmp.ne.s32.totalorder %s163, %s164
      %p176 = scmp.eq.s32.totalorder %s28, 1
      %p177 = por %p175, %p176
      %p179 = scmp.ne.s32.totalorder %s164, %s178
      %p180 = scmp.eq.s32.totalorder %s28, 0
      %p181 = por %p179, %p180
      %s183 = sadd.s32 %s182, 1
      %p186 = scmp.eq.s32.totalorder %s22, 1
      %p187 = scmp.ne.s32.totalorder %s182, %s184
      %p188 = scmp.eq.s32.totalorder %s22, 0
      %p189 = por %p187, %p188
      %p190 = scmp.ne.s32.totalorder %s182, %s184
      %p191 = scmp.eq.s32.totalorder %s27, 1
      %p192 = por %p190, %p191
      %p193 = scmp.ne.s32.totalorder %s184, %s185
      %p194 = scmp.eq.s32.totalorder %s27, 0
      %p195 = por %p193, %p194
      %p196 = scmp.ne.s32.totalorder %s184, %s185
      %p197 = scmp.eq.s32.totalorder %s28, 1
      %p198 = por %p196, %p197
      %p200 = scmp.ne.s32.totalorder %s185, %s199
      %p201 = scmp.eq.s32.totalorder %s28, 0
      %p202 = por %p200, %p201
      %s204 = sadd.s32 %s203, 1
      %p207 = scmp.eq.s32.totalorder %s22, 1
      %p208 = scmp.ne.s32.totalorder %s203, %s205
      %p209 = scmp.eq.s32.totalorder %s22, 0
      %p210 = por %p208, %p209
      %p211 = scmp.ne.s32.totalorder %s203, %s205
      %p212 = scmp.eq.s32.totalorder %s27, 1
      %p213 = por %p211, %p212
      %p214 = scmp.ne.s32.totalorder %s205, %s206
      %p215 = scmp.eq.s32.totalorder %s27, 0
      %p216 = por %p214, %p215
      %p217 = scmp.ne.s32.totalorder %s205, %s206
      %p218 = scmp.eq.s32.totalorder %s28, 1
      %p219 = por %p217, %p218
      %p221 = scmp.ne.s32.totalorder %s206, %s220
      %p222 = scmp.eq.s32.totalorder %s28, 0
      %p223 = por %p221, %p222
      %s225 = sadd.s32 %s224, 1
      %p228 = scmp.eq.s32.totalorder %s22, 1
      %p229 = scmp.ne.s32.totalorder %s224, %s226
      %p230 = scmp.eq.s32.totalorder %s22, 0
      %p231 = por %p229, %p230
      %p232 = scmp.ne.s32.totalorder %s224, %s226
      %p233 = scmp.eq.s32.totalorder %s27, 1
      %p234 = por %p232, %p233
      %p235 = scmp.ne.s32.totalorder %s226, %s227
      %p236 = scmp.eq.s32.totalorder %s27, 0
      %p237 = por %p235, %p236
      %p238 = scmp.ne.s32.totalorder %s226, %s227
      %p239 = scmp.eq.s32.totalorder %s28, 1
      %p240 = por %p238, %p239
      %p242 = scmp.ne.s32.totalorder %s227, %s241
      %p243 = scmp.eq.s32.totalorder %s28, 0
      %p244 = por %p242, %p243
      %s246 = sadd.s32 %s245, 1
      %p249 = scmp.eq.s32.totalorder %s22, 1
      %p250 = scmp.ne.s32.totalorder %s245, %s247
      %p251 = scmp.eq.s32.totalorder %s22, 0
      %p252 = por %p250, %p251
      %p253 = scmp.ne.s32.totalorder %s245, %s247
      %p254 = scmp.eq.s32.totalorder %s27, 1
      %p255 = por %p253, %p254
      %p256 = scmp.ne.s32.totalorder %s247, %s248
      %p257 = scmp.eq.s32.totalorder %s27, 0
      %p258 = por %p256, %p257
      %p259 = scmp.ne.s32.totalorder %s247, %s248
      %p260 = scmp.eq.s32.totalorder %s28, 1
      %p261 = por %p259, %p260
      %p263 = scmp.ne.s32.totalorder %s248, %s262
      %p264 = scmp.eq.s32.totalorder %s28, 0
      %p265 = por %p263, %p264
      %s267 = sadd.s32 %s266, 1
      %p270 = scmp.eq.s32.totalorder %s22, 1
      %p271 = scmp.ne.s32.totalorder %s266, %s268
      %p272 = scmp.eq.s32.totalorder %s22, 0
      %p273 = por %p271, %p272
      %p274 = scmp.ne.s32.totalorder %s266, %s268
      %p275 = scmp.eq.s32.totalorder %s27, 1
      %p276 = por %p274, %p275
      %p277 = scmp.ne.s32.totalorder %s268, %s269
      %p278 = scmp.eq.s32.totalorder %s27, 0
      %p279 = por %p277, %p278
      %p280 = scmp.ne.s32.totalorder %s268, %s269
      %p281 = scmp.eq.s32.totalorder %s28, 1
      %p282 = por %p280, %p281
      %p284 = scmp.ne.s32.totalorder %s269, %s283
      %p285 = scmp.eq.s32.totalorder %s28, 0
      %p286 = por %p284, %p285
      %s288 = sadd.s32 %s287, 1
      %p291 = scmp.eq.s32.totalorder %s22, 1
      %p292 = scmp.ne.s32.totalorder %s287, %s289
      %p293 = scmp.eq.s32.totalorder %s22, 0
      %p294 = por %p292, %p293
      %p295 = scmp.ne.s32.totalorder %s287, %s289
      %p296 = scmp.eq.s32.totalorder %s27, 1
      %p297 = por %p295, %p296
      %p298 = scmp.ne.s32.totalorder %s289, %s290
      %p299 = scmp.eq.s32.totalorder %s27, 0
      %p300 = por %p298, %p299
      %p301 = scmp.ne.s32.totalorder %s289, %s290
      %p302 = scmp.eq.s32.totalorder %s28, 1
      %p303 = por %p301, %p302
      %p305 = scmp.ne.s32.totalorder %s290, %s304
      %p306 = scmp.eq.s32.totalorder %s28, 0
      %p307 = por %p305, %p306
      %s308 = ssub.s32 %s22, %s29
      %p309 = scmp.eq.s32.totalorder %s308, 0
      %s311 = sadd.s32 %s310, 1
      %s312 = scalar_select %p309, %s310, %s311
      %p315 = pneg %p309
      %p316 = scmp.eq.s32.totalorder %s22, 1
      %p317 = por %p315, %p316
      %p318 = scmp.ne.s32.totalorder %s310, %s313
      %p319 = scmp.eq.s32.totalorder %s22, 0
      %p320 = por %p318, %p319
      %p321 = scmp.ne.s32.totalorder %s310, %s313
      %p322 = scmp.eq.s32.totalorder %s27, 1
      %p323 = por %p321, %p322
      %p324 = scmp.ne.s32.totalorder %s313, %s314
      %p325 = scmp.eq.s32.totalorder %s27, 0
      %p326 = por %p324, %p325
      %p327 = scmp.ne.s32.totalorder %s313, %s314
      %p328 = scmp.eq.s32.totalorder %s28, 1
      %p329 = por %p327, %p328
      %p331 = scmp.ne.s32.totalorder %s314, %s330
      %p332 = scmp.eq.s32.totalorder %s28, 0
      %p333 = por %p331, %p332
      %p334 = scmp.le.s32.totalorder 1, %s22
      %p335 = scmp.lt.s32.totalorder %s22, 3
      %p336 = pnand %p334, %p335
      %p337 = pneg %p336
      // Predicated region
      $region9: #{tpu_custom_call.1} parent=5 // pred_check
        _
      $region10: #{tpu_custom_call.1} parent=5 // pred_check_branch
        %339 = sbr.rel (%p336) target = $region12
      $region11: #{tpu_custom_call.1} parent=5 // pred_region
        %s340 = ssub.s32 %s22, 1
        // Predicated region
        $region13: #{tpu_custom_call.1} parent=11 // pred_check
          %p341 = pneg %p69
        $region14: #{tpu_custom_call.1} parent=11 // pred_check_branch
          %343 = sbr.rel (%p341) target = $region16
        $region15: #{tpu_custom_call.1} parent=11 // pred_region
          _
        $region16: #{tpu_custom_call.1} parent=11 // pred_fallthru
          _
        // Predicated region
        $region17: #{tpu_custom_call.1} parent=11 // pred_check
          %p344 = pneg %p90
        $region18: #{tpu_custom_call.1} parent=11 // pred_check_branch
          %346 = sbr.rel (%p344) target = $region20
        $region19: #{tpu_custom_call.1} parent=11 // pred_region
          _
        $region20: #{tpu_custom_call.1} parent=11 // pred_fallthru
          _
        // Predicated region
        $region21: #{tpu_custom_call.1} parent=11 // pred_check
          %p347 = pneg %p111
        $region22: #{tpu_custom_call.1} parent=11 // pred_check_branch
          %349 = sbr.rel (%p347) target = $region24
        $region23: #{tpu_custom_call.1} parent=11 // pred_region
          _
        $region24: #{tpu_custom_call.1} parent=11 // pred_fallthru
          _
        // Predicated region
        $region25: #{tpu_custom_call.1} parent=11 // pred_check
          %p350 = pneg %p132
        $region26: #{tpu_custom_call.1} parent=11 // pred_check_branch
          %352 = sbr.rel (%p350) target = $region28
        $region27: #{tpu_custom_call.1} parent=11 // pred_region
          _
        $region28: #{tpu_custom_call.1} parent=11 // pred_fallthru
          _
        // Predicated region
        $region29: #{tpu_custom_call.1} parent=11 // pred_check
          %p353 = pneg %p153
        $region30: #{tpu_custom_call.1} parent=11 // pred_check_branch
          %355 = sbr.rel (%p353) target = $region32
        $region31: #{tpu_custom_call.1} parent=11 // pred_region
          _
        $region32: #{tpu_custom_call.1} parent=11 // pred_fallthru
          _
        // Predicated region
        $region33: #{tpu_custom_call.1} parent=11 // pred_check
          %p356 = pneg %p174
        $region34: #{tpu_custom_call.1} parent=11 // pred_check_branch
          %358 = sbr.rel (%p356) target = $region36
        $region35: #{tpu_custom_call.1} parent=11 // pred_region
          _
        $region36: #{tpu_custom_call.1} parent=11 // pred_fallthru
          _
        // Predicated region
        $region37: #{tpu_custom_call.1} parent=11 // pred_check
          %p359 = pneg %p195
        $region38: #{tpu_custom_call.1} parent=11 // pred_check_branch
          %361 = sbr.rel (%p359) target = $region40
        $region39: #{tpu_custom_call.1} parent=11 // pred_region
          _
        $region40: #{tpu_custom_call.1} parent=11 // pred_fallthru
          _
        // Predicated region
        $region41: #{tpu_custom_call.1} parent=11 // pred_check
          %p362 = pneg %p216
        $region42: #{tpu_custom_call.1} parent=11 // pred_check_branch
          %364 = sbr.rel (%p362) target = $region44
        $region43: #{tpu_custom_call.1} parent=11 // pred_region
          _
        $region44: #{tpu_custom_call.1} parent=11 // pred_fallthru
          _
        // Predicated region
        $region45: #{tpu_custom_call.1} parent=11 // pred_check
          %p365 = pneg %p237
        $region46: #{tpu_custom_call.1} parent=11 // pred_check_branch
          %367 = sbr.rel (%p365) target = $region48
        $region47: #{tpu_custom_call.1} parent=11 // pred_region
          _
        $region48: #{tpu_custom_call.1} parent=11 // pred_fallthru
          _
        // Predicated region
        $region49: #{tpu_custom_call.1} parent=11 // pred_check
          %p368 = pneg %p258
        $region50: #{tpu_custom_call.1} parent=11 // pred_check_branch
          %370 = sbr.rel (%p368) target = $region52
        $region51: #{tpu_custom_call.1} parent=11 // pred_region
          _
        $region52: #{tpu_custom_call.1} parent=11 // pred_fallthru
          _
        // Predicated region
        $region53: #{tpu_custom_call.1} parent=11 // pred_check
          %p371 = pneg %p279
        $region54: #{tpu_custom_call.1} parent=11 // pred_check_branch
          %373 = sbr.rel (%p371) target = $region56
        $region55: #{tpu_custom_call.1} parent=11 // pred_region
          _
        $region56: #{tpu_custom_call.1} parent=11 // pred_fallthru
          _
        // Predicated region
        $region57: #{tpu_custom_call.1} parent=11 // pred_check
          %p374 = pneg %p300
        $region58: #{tpu_custom_call.1} parent=11 // pred_check_branch
          %376 = sbr.rel (%p374) target = $region60
        $region59: #{tpu_custom_call.1} parent=11 // pred_region
          _
        $region60: #{tpu_custom_call.1} parent=11 // pred_fallthru
          _
      $region12: #{tpu_custom_call.1} parent=5 // pred_fallthru
        _
      %p377 = scmp.lt.s32.totalorder %s22, 2
      // Predicated region
      $region61: #{tpu_custom_call.1} parent=5 // pred_check
        %p378 = pneg %p377
      $region62: #{tpu_custom_call.1} parent=5 // pred_check_branch
        %380 = sbr.rel (%p378) target = $region64
      $region63: #{tpu_custom_call.1} parent=5 // pred_region
        // Predicated region
        $region65: #{tpu_custom_call.1} parent=63 // pred_check
          %p381 = pneg %p42
        $region66: #{tpu_custom_call.1} parent=63 // pred_check_branch
          %383 = sbr.rel (%p381) target = $region68
        $region67: #{tpu_custom_call.1} parent=63 // pred_region
          %p384 = scmp.lt.s32.totalorder %s22, 1
          %s385 = scalar_select %p384, %s22, 1
          %s386 = smul.addr %s385, 4
          %s387 = scalar_lea.vmem %s0, %s386
        $region68: #{tpu_custom_call.1} parent=63 // pred_fallthru
          _
      $region64: #{tpu_custom_call.1} parent=5 // pred_fallthru
        _
      %p388 = scmp.le.s32.totalorder 1, %s22
      %p389 = scmp.lt.s32.totalorder %s22, 3
      %p390 = pnand %p388, %p389
      %p391 = pneg %p390
      // Predicated region
      $region69: #{tpu_custom_call.1} parent=5 // pred_check
        _
      $region70: #{tpu_custom_call.1} parent=5 // pred_check_branch
        %393 = sbr.rel (%p390) target = $region72
      $region71: #{tpu_custom_call.1} parent=5 // pred_region
        %s394 = ssub.s32 %s22, 1
        %p395 = scmp.lt.s32.totalorder %s27, 1
        %s396 = scalar_select %p395, %s27, 1
        %s397 = smul.addr %s396, 4
        %s398 = scalar_lea.vmem %s0, %s397
        %p399 = pneg %p48
        %p400 = pneg %p45
        %p401 = pneg %p69
        %p402 = pneg %p66
        %p403 = pneg %p90
        %p404 = pneg %p87
        %p405 = pneg %p111
        %p406 = pneg %p108
        %p407 = pneg %p132
        %p408 = pneg %p129
        %p409 = pneg %p153
        %p410 = pneg %p150
        %p411 = pneg %p174
        %p412 = pneg %p171
        %p413 = pneg %p195
        %p414 = pneg %p192
        %p415 = pneg %p216
        %p416 = pneg %p213
        %p417 = pneg %p237
        %p418 = pneg %p234
        %p419 = pneg %p258
        %p420 = pneg %p255
        %p421 = pneg %p279
        %p422 = pneg %p276
        %p423 = pneg %p300
        %p424 = pneg %p297
        %p425 = pneg %p326
        %p426 = pneg %p323
        %s427 = sand.u32 %s313, 1
        %s428 = scalar_lea.sflag [#allocation3], %s427
        %s429 = sand.u32 %s313, 1
        %s430 = smul.addr %s429, 8
        %s431 = scalar_lea.vmem [#allocation2], %s430
        %p432 = scmp.lt.s32.totalorder %s27, 1
        %s433 = scalar_select %p432, %s27, 1
        %s434 = smul.addr %s433, 4
        %s435 = scalar_lea.vmem %s0, %s434
        %v436 = vld [vmem:[%s435] sm:$0xf]
        %v437 = vld [vmem:[%s12] sm:$0x7f]
        %v438 = vlaneseq
        %v439 = vshrl.u32 %v438, 7
        %v440 = vsub.s32 0, %v439
        %v441 = vrot.slane %v437, %v440
        %v442 = vmul.f32 %v436, %v441
        %443 = vrot.lane.b32.xlu0 %v436, 127
        %v444 = vpop.permute.xlu0 %443
        %v445 = vlaneseq
        %v446 = vshrl.u32 %v445, 7
        %v447 = vsub.s32 1, %v446
        %v448 = vrot.slane %v437, %v447
        %v449 = vmul.f32 %v444, %v448
        %v450 = vadd.f32 %v442, %v449
        %451 = vrot.lane.b32.xlu0 %v436, 126
        %v452 = vpop.permute.xlu0 %451
        %v453 = vlaneseq
        %v454 = vshrl.u32 %v453, 7
        %v455 = vsub.s32 2, %v454
        %v456 = vrot.slane %v437, %v455
        %v457 = vmul.f32 %v452, %v456
        %v458 = vadd.f32 %v450, %v457
        %459 = vrot.lane.b32.xlu0 %v436, 125
        %v460 = vpop.permute.xlu0 %459
        %v461 = vlaneseq
        %v462 = vshrl.u32 %v461, 7
        %v463 = vsub.s32 3, %v462
        %v464 = vrot.slane %v437, %v463
        %v465 = vmul.f32 %v460, %v464
        %v466 = vadd.f32 %v458, %v465
        %467 = vrot.lane.b32.xlu0 %v436, 124
        %v468 = vpop.permute.xlu0 %467
        %v469 = vlaneseq
        %v470 = vshrl.u32 %v469, 7
        %v471 = vsub.s32 4, %v470
        %v472 = vrot.slane %v437, %v471
        %v473 = vmul.f32 %v468, %v472
        %v474 = vadd.f32 %v466, %v473
        %475 = vrot.lane.b32.xlu0 %v436, 123
        %v476 = vpop.permute.xlu0 %475
        %v477 = vlaneseq
        %v478 = vshrl.u32 %v477, 7
        %v479 = vsub.s32 5, %v478
        %v480 = vrot.slane %v437, %v479
        %v481 = vmul.f32 %v476, %v480
        %v482 = vadd.f32 %v474, %v481
        %483 = vrot.lane.b32.xlu0 %v436, 122
        %v484 = vpop.permute.xlu0 %483
        %v485 = vlaneseq
        %v486 = vshrl.u32 %v485, 7
        %v487 = vsub.s32 6, %v486
        %v488 = vrot.slane %v437, %v487
        %v489 = vmul.f32 %v484, %v488
        %v490 = vadd.f32 %v482, %v489
        %v491 = vld [vmem:[%s10] sm:$0xff]
        %v492 = vld [vmem:[%s11] sm:$0xff]
        %494 = vset.pattern.permute.xlu0 0
        %495 = vperm.xlu0 %494, %v492
        %v496 = vpop.permute.xlu0 %495
        %vm498 = vcmask 31744
        %v500 = vsel %vm498, %v491, 0
        %vm502 = vcmask 1043456
        %v504 = vsel %vm502, %v490, 0
        %506 = vmatprep.subr.mxu0 0.0
        %507 = vmatpush1.msra.mxu0 %v504
        %508 = vmatprep.subr.mxu0 0.0
        %509 = vmatpush1.msra.mxu0 0.0
        %510 = vmatprep.subr.mxu0 0.0
        %511 = vmatpush1.msra.mxu0 0.0
        %512 = vmatprep.subr.mxu0 0.0
        %513 = vmatpush1.msra.mxu0 0.0
        %514 = vmatprep.subr.mxu0 0.0
        %515 = vmatpush1.msra.mxu0 0.0
        %516 = vmatprep.subr.mxu0 0.0
        %517 = vmatpush1.msra.mxu0 0.0
        %518 = vmatprep.subr.mxu0 0.0
        %519 = vmatpush1.msra.mxu0 0.0
        %520 = vmatprep.subr.mxu0 0.0
        %521 = vmatpush1.msra.mxu0 0.0
        %522 = vmatprep.subr.mxu0 0.0
        %523 = vmatpush1.msra.mxu0 0.0
        %524 = vmatprep.subr.mxu0 0.0
        %525 = vmatpush1.msra.mxu0 0.0
        %526 = vmatprep.subr.mxu0 0.0
        %527 = vmatpush1.msra.mxu0 0.0
        %528 = vmatprep.subr.mxu0 0.0
        %529 = vmatpush1.msra.mxu0 0.0
        %530 = vmatprep.subr.mxu0 0.0
        %531 = vmatpush1.msra.mxu0 0.0
        %532 = vmatprep.subr.mxu0 0.0
        %533 = vmatpush1.msra.mxu0 0.0
        %534 = vmatprep.subr.mxu0 0.0
        %535 = vmatpush1.msra.mxu0 0.0
        %536 = vmatprep.subr.mxu0 0.0
        %537 = vmatpush1.msra.mxu0 0.0
        %538 = vmatprep.subr.mxu0 0.0
        %539 = vmatpush1.msra.mxu0 0.0
        %540 = vmatprep.subr.mxu0 0.0
        %541 = vmatpush1.msra.mxu0 0.0
        %542 = vmatprep.subr.mxu0 0.0
        %543 = vmatpush1.msra.mxu0 0.0
        %544 = vmatprep.subr.mxu0 0.0
        %545 = vmatpush1.msra.mxu0 0.0
        %546 = vmatprep.subr.mxu0 0.0
        %547 = vmatpush1.msra.mxu0 0.0
        %548 = vmatprep.subr.mxu0 0.0
        %549 = vmatpush1.msra.mxu0 0.0
        %550 = vmatprep.subr.mxu0 0.0
        %551 = vmatpush1.msra.mxu0 0.0
        %552 = vmatprep.subr.mxu0 0.0
        %553 = vmatpush1.msra.mxu0 0.0
        %554 = vmatprep.subr.mxu0 0.0
        %555 = vmatpush1.msra.mxu0 0.0
        %556 = vmatprep.subr.mxu0 0.0
        %557 = vmatpush1.msra.mxu0 0.0
        %558 = vmatprep.subr.mxu0 0.0
        %559 = vmatpush1.msra.mxu0 0.0
        %560 = vmatprep.subr.mxu0 0.0
        %561 = vmatpush1.msra.mxu0 0.0
        %562 = vmatprep.subr.mxu0 0.0
        %563 = vmatpush1.msra.mxu0 0.0
        %564 = vmatprep.subr.mxu0 0.0
        %565 = vmatpush1.msra.mxu0 0.0
        %566 = vmatprep.subr.mxu0 0.0
        %567 = vmatpush1.msra.mxu0 0.0
        %568 = vmatprep.subr.mxu0 0.0
        %569 = vmatpush1.msra.mxu0 0.0
        %570 = vmatprep.mubr.f32.mxu0 0.0
        %571 = vmatmul.mubr.f32.gmra.mrb[0].mxu0 %v500
        %v572 = vpop.f32.mrb[0].mxu0
        %v573 = vadd.f32 %v496, %v572
        %v574 = vpop.f32.mrb[0].mxu0
        %575 = vdwg.mxu0
        %v576 = vld [vmem:[%s1] sm:$0xf]
        %578 = vset.pattern.permute.xlu0 0
        %579 = vperm.xlu0 %578, %v576
        %v580 = vpop.permute.xlu0 %579
        %v582 = vmul.f32 %v436, %v580
        %583 = vset.pattern.permute.xlu0 1
        %584 = vperm.xlu0 %583, %v576
        %v585 = vpop.permute.xlu0 %584
        %v587 = vmul.f32 %v444, %v585
        %v588 = vadd.f32 %v582, %v587
        %589 = vset.pattern.permute.xlu0 2
        %590 = vperm.xlu0 %589, %v576
        %v591 = vpop.permute.xlu0 %590
        %v593 = vmul.f32 %v452, %v591
        %v594 = vadd.f32 %v588, %v593
        %v595 = vld [vmem:[%s2] sm:$0xff]
        %v596 = vld [vmem:[%s3] sm:$0xff]
        %598 = vset.pattern.permute.xlu0 0
        %599 = vperm.xlu0 %598, %v596
        %v600 = vpop.permute.xlu0 %599
        %v603 = vsel %vm498, %v595, 0
        %v606 = vsel %vm502, %v594, 0
        %608 = vmatprep.subr.mxu0 0.0
        %609 = vmatpush1.msra.mxu0 %v606
        %610 = vmatprep.subr.mxu0 0.0
        %611 = vmatpush1.msra.mxu0 0.0
        %612 = vmatprep.subr.mxu0 0.0
        %613 = vmatpush1.msra.mxu0 0.0
        %614 = vmatprep.subr.mxu0 0.0
        %615 = vmatpush1.msra.mxu0 0.0
        %616 = vmatprep.subr.mxu0 0.0
        %617 = vmatpush1.msra.mxu0 0.0
        %618 = vmatprep.subr.mxu0 0.0
        %619 = vmatpush1.msra.mxu0 0.0
        %620 = vmatprep.subr.mxu0 0.0
        %621 = vmatpush1.msra.mxu0 0.0
        %622 = vmatprep.subr.mxu0 0.0
        %623 = vmatpush1.msra.mxu0 0.0
        %624 = vmatprep.subr.mxu0 0.0
        %625 = vmatpush1.msra.mxu0 0.0
        %626 = vmatprep.subr.mxu0 0.0
        %627 = vmatpush1.msra.mxu0 0.0
        %628 = vmatprep.subr.mxu0 0.0
        %629 = vmatpush1.msra.mxu0 0.0
        %630 = vmatprep.subr.mxu0 0.0
        %631 = vmatpush1.msra.mxu0 0.0
        %632 = vmatprep.subr.mxu0 0.0
        %633 = vmatpush1.msra.mxu0 0.0
        %634 = vmatprep.subr.mxu0 0.0
        %635 = vmatpush1.msra.mxu0 0.0
        %636 = vmatprep.subr.mxu0 0.0
        %637 = vmatpush1.msra.mxu0 0.0
        %638 = vmatprep.subr.mxu0 0.0
        %639 = vmatpush1.msra.mxu0 0.0
        %640 = vmatprep.subr.mxu0 0.0
        %641 = vmatpush1.msra.mxu0 0.0
        %642 = vmatprep.subr.mxu0 0.0
        %643 = vmatpush1.msra.mxu0 0.0
        %644 = vmatprep.subr.mxu0 0.0
        %645 = vmatpush1.msra.mxu0 0.0
        %646 = vmatprep.subr.mxu0 0.0
        %647 = vmatpush1.msra.mxu0 0.0
        %648 = vmatprep.subr.mxu0 0.0
        %649 = vmatpush1.msra.mxu0 0.0
        %650 = vmatprep.subr.mxu0 0.0
        %651 = vmatpush1.msra.mxu0 0.0
        %652 = vmatprep.subr.mxu0 0.0
        %653 = vmatpush1.msra.mxu0 0.0
        %654 = vmatprep.subr.mxu0 0.0
        %655 = vmatpush1.msra.mxu0 0.0
        %656 = vmatprep.subr.mxu0 0.0
        %657 = vmatpush1.msra.mxu0 0.0
        %658 = vmatprep.subr.mxu0 0.0
        %659 = vmatpush1.msra.mxu0 0.0
        %660 = vmatprep.subr.mxu0 0.0
        %661 = vmatpush1.msra.mxu0 0.0
        %662 = vmatprep.subr.mxu0 0.0
        %663 = vmatpush1.msra.mxu0 0.0
        %664 = vmatprep.subr.mxu0 0.0
        %665 = vmatpush1.msra.mxu0 0.0
        %666 = vmatprep.subr.mxu0 0.0
        %667 = vmatpush1.msra.mxu0 0.0
        %668 = vmatprep.subr.mxu0 0.0
        %669 = vmatpush1.msra.mxu0 0.0
        %670 = vmatprep.subr.mxu0 0.0
        %671 = vmatpush1.msra.mxu0 0.0
        %672 = vmatprep.mubr.f32.mxu0 0.0
        %673 = vmatmul.mubr.f32.gmra.mrb[0].mxu0 %v603
        %v674 = vpop.f32.mrb[0].mxu0
        %v675 = vadd.f32 %v600, %v674
        %v676 = vpop.f32.mrb[0].mxu0
        %677 = vdwg.mxu0
        %v678 = vmax.f32 %v675, 0.0
        %v679 = vld [vmem:[%s4] sm:$0xff]
        %681 = vset.pattern.permute.xlu0 0
        %682 = vperm.xlu0 %681, %v679
        %v683 = vpop.permute.xlu0 %682
        %v685 = vmul.f32 %v678, %v683
        %686 = vrot.lane.b32.xlu0 %v678, 127
        %v687 = vpop.permute.xlu0 %686
        %688 = vset.pattern.permute.xlu0 1
        %689 = vperm.xlu0 %688, %v679
        %v690 = vpop.permute.xlu0 %689
        %v692 = vmul.f32 %v687, %v690
        %v693 = vadd.f32 %v685, %v692
        %694 = vrot.lane.b32.xlu0 %v678, 126
        %v695 = vpop.permute.xlu0 %694
        %696 = vset.pattern.permute.xlu0 2
        %697 = vperm.xlu0 %696, %v679
        %v698 = vpop.permute.xlu0 %697
        %v700 = vmul.f32 %v695, %v698
        %v701 = vadd.f32 %v693, %v700
        %v702 = vld [vmem:[%s5] sm:$0xff]
        %v703 = vld [vmem:[%s6] sm:$0xff]
        %705 = vset.pattern.permute.xlu0 0
        %706 = vperm.xlu0 %705, %v703
        %v707 = vpop.permute.xlu0 %706
        %vm709 = vcmask 64512
        %v711 = vsel %vm709, %v702, 0
        %713 = vmatprep.subr.mxu0 0.0
        %714 = vmatpush1.msra.mxu0 %v701
        %715 = vmatprep.subr.mxu0 0.0
        %716 = vmatpush1.msra.mxu0 0.0
        %717 = vmatprep.subr.mxu0 0.0
        %718 = vmatpush1.msra.mxu0 0.0
        %719 = vmatprep.subr.mxu0 0.0
        %720 = vmatpush1.msra.mxu0 0.0
        %721 = vmatprep.subr.mxu0 0.0
        %722 = vmatpush1.msra.mxu0 0.0
        %723 = vmatprep.subr.mxu0 0.0
        %724 = vmatpush1.msra.mxu0 0.0
        %725 = vmatprep.subr.mxu0 0.0
        %726 = vmatpush1.msra.mxu0 0.0
        %727 = vmatprep.subr.mxu0 0.0
        %728 = vmatpush1.msra.mxu0 0.0
        %729 = vmatprep.subr.mxu0 0.0
        %730 = vmatpush1.msra.mxu0 0.0
        %731 = vmatprep.subr.mxu0 0.0
        %732 = vmatpush1.msra.mxu0 0.0
        %733 = vmatprep.subr.mxu0 0.0
        %734 = vmatpush1.msra.mxu0 0.0
        %735 = vmatprep.subr.mxu0 0.0
        %736 = vmatpush1.msra.mxu0 0.0
        %737 = vmatprep.subr.mxu0 0.0
        %738 = vmatpush1.msra.mxu0 0.0
        %739 = vmatprep.subr.mxu0 0.0
        %740 = vmatpush1.msra.mxu0 0.0
        %741 = vmatprep.subr.mxu0 0.0
        %742 = vmatpush1.msra.mxu0 0.0
        %743 = vmatprep.subr.mxu0 0.0
        %744 = vmatpush1.msra.mxu0 0.0
        %745 = vmatprep.subr.mxu0 0.0
        %746 = vmatpush1.msra.mxu0 0.0
        %747 = vmatprep.subr.mxu0 0.0
        %748 = vmatpush1.msra.mxu0 0.0
        %749 = vmatprep.subr.mxu0 0.0
        %750 = vmatpush1.msra.mxu0 0.0
        %751 = vmatprep.subr.mxu0 0.0
        %752 = vmatpush1.msra.mxu0 0.0
        %753 = vmatprep.subr.mxu0 0.0
        %754 = vmatpush1.msra.mxu0 0.0
        %755 = vmatprep.subr.mxu0 0.0
        %756 = vmatpush1.msra.mxu0 0.0
        %757 = vmatprep.subr.mxu0 0.0
        %758 = vmatpush1.msra.mxu0 0.0
        %759 = vmatprep.subr.mxu0 0.0
        %760 = vmatpush1.msra.mxu0 0.0
        %761 = vmatprep.subr.mxu0 0.0
        %762 = vmatpush1.msra.mxu0 0.0
        %763 = vmatprep.subr.mxu0 0.0
        %764 = vmatpush1.msra.mxu0 0.0
        %765 = vmatprep.subr.mxu0 0.0
        %766 = vmatpush1.msra.mxu0 0.0
        %767 = vmatprep.subr.mxu0 0.0
        %768 = vmatpush1.msra.mxu0 0.0
        %769 = vmatprep.subr.mxu0 0.0
        %770 = vmatpush1.msra.mxu0 0.0
        %771 = vmatprep.subr.mxu0 0.0
        %772 = vmatpush1.msra.mxu0 0.0
        %773 = vmatprep.subr.mxu0 0.0
        %774 = vmatpush1.msra.mxu0 0.0
        %775 = vmatprep.subr.mxu0 0.0
        %776 = vmatpush1.msra.mxu0 0.0
        %777 = vmatprep.mubr.f32.mxu0 0.0
        %778 = vmatmul.mubr.f32.gmra.mrb[0].mxu0 %v711
        %v779 = vpop.f32.mrb[0].mxu0
        %v780 = vadd.f32 %v707, %v779
        %v781 = vpop.f32.mrb[0].mxu0
        %782 = vdwg.mxu0
        %v783 = vmax.f32 %v780, 0.0
        %v784 = vld [vmem:[%s7] sm:$0xff]
        %786 = vset.pattern.permute.xlu0 0
        %787 = vperm.xlu0 %786, %v784
        %v788 = vpop.permute.xlu0 %787
        %v790 = vmul.f32 %v783, %v788
        %791 = vrot.lane.b32.xlu0 %v783, 127
        %v792 = vpop.permute.xlu0 %791
        %793 = vset.pattern.permute.xlu0 1
        %794 = vperm.xlu0 %793, %v784
        %v795 = vpop.permute.xlu0 %794
        %v797 = vmul.f32 %v792, %v795
        %v798 = vadd.f32 %v790, %v797
        %799 = vrot.lane.b32.xlu0 %v783, 126
        %v800 = vpop.permute.xlu0 %799
        %801 = vset.pattern.permute.xlu0 2
        %802 = vperm.xlu0 %801, %v784
        %v803 = vpop.permute.xlu0 %802
        %v805 = vmul.f32 %v800, %v803
        %v806 = vadd.f32 %v798, %v805
        %v807 = vld [vmem:[%s8] sm:$0xff]
        %v808 = vld [vmem:[%s9] sm:$0xff]
        %810 = vset.pattern.permute.xlu0 0
        %811 = vperm.xlu0 %810, %v808
        %v812 = vpop.permute.xlu0 %811
        %v815 = vsel %vm709, %v807, 0
        %817 = vmatprep.subr.mxu0 0.0
        %818 = vmatpush1.msra.mxu0 %v806
        %819 = vmatprep.subr.mxu0 0.0
        %820 = vmatpush1.msra.mxu0 0.0
        %821 = vmatprep.subr.mxu0 0.0
        %822 = vmatpush1.msra.mxu0 0.0
        %823 = vmatprep.subr.mxu0 0.0
        %824 = vmatpush1.msra.mxu0 0.0
        %825 = vmatprep.subr.mxu0 0.0
        %826 = vmatpush1.msra.mxu0 0.0
        %827 = vmatprep.subr.mxu0 0.0
        %828 = vmatpush1.msra.mxu0 0.0
        %829 = vmatprep.subr.mxu0 0.0
        %830 = vmatpush1.msra.mxu0 0.0
        %831 = vmatprep.subr.mxu0 0.0
        %832 = vmatpush1.msra.mxu0 0.0
        %833 = vmatprep.subr.mxu0 0.0
        %834 = vmatpush1.msra.mxu0 0.0
        %835 = vmatprep.subr.mxu0 0.0
        %836 = vmatpush1.msra.mxu0 0.0
        %837 = vmatprep.subr.mxu0 0.0
        %838 = vmatpush1.msra.mxu0 0.0
        %839 = vmatprep.subr.mxu0 0.0
        %840 = vmatpush1.msra.mxu0 0.0
        %841 = vmatprep.subr.mxu0 0.0
        %842 = vmatpush1.msra.mxu0 0.0
        %843 = vmatprep.subr.mxu0 0.0
        %844 = vmatpush1.msra.mxu0 0.0
        %845 = vmatprep.subr.mxu0 0.0
        %846 = vmatpush1.msra.mxu0 0.0
        %847 = vmatprep.subr.mxu0 0.0
        %848 = vmatpush1.msra.mxu0 0.0
        %849 = vmatprep.subr.mxu0 0.0
        %850 = vmatpush1.msra.mxu0 0.0
        %851 = vmatprep.subr.mxu0 0.0
        %852 = vmatpush1.msra.mxu0 0.0
        %853 = vmatprep.subr.mxu0 0.0
        %854 = vmatpush1.msra.mxu0 0.0
        %855 = vmatprep.subr.mxu0 0.0
        %856 = vmatpush1.msra.mxu0 0.0
        %857 = vmatprep.subr.mxu0 0.0
        %858 = vmatpush1.msra.mxu0 0.0
        %859 = vmatprep.subr.mxu0 0.0
        %860 = vmatpush1.msra.mxu0 0.0
        %861 = vmatprep.subr.mxu0 0.0
        %862 = vmatpush1.msra.mxu0 0.0
        %863 = vmatprep.subr.mxu0 0.0
        %864 = vmatpush1.msra.mxu0 0.0
        %865 = vmatprep.subr.mxu0 0.0
        %866 = vmatpush1.msra.mxu0 0.0
        %867 = vmatprep.subr.mxu0 0.0
        %868 = vmatpush1.msra.mxu0 0.0
        %869 = vmatprep.subr.mxu0 0.0
        %870 = vmatpush1.msra.mxu0 0.0
        %871 = vmatprep.subr.mxu0 0.0
        %872 = vmatpush1.msra.mxu0 0.0
        %873 = vmatprep.subr.mxu0 0.0
        %874 = vmatpush1.msra.mxu0 0.0
        %875 = vmatprep.subr.mxu0 0.0
        %876 = vmatpush1.msra.mxu0 0.0
        %877 = vmatprep.subr.mxu0 0.0
        %878 = vmatpush1.msra.mxu0 0.0
        %879 = vmatprep.subr.mxu0 0.0
        %880 = vmatpush1.msra.mxu0 0.0
        %881 = vmatprep.mubr.f32.mxu0 0.0
        %882 = vmatmul.mubr.f32.gmra.mrb[0].mxu0 %v815
        %v883 = vpop.f32.mrb[0].mxu0
        %v884 = vadd.f32 %v812, %v883
        %v885 = vpop.f32.mrb[0].mxu0
        %886 = vdwg.mxu0
        %v887 = vadd.f32 %v884, %v573
        %v888 = vmax.f32 %v887, 0.0
        %889 = vst [vmem:[%s431] sm:$0xff] %v888
        %s890 = sand.u32 %s313, 1
        %s891 = scalar_lea.sflag [#allocation3], %s890
        %s892 = sand.u32 %s313, 1
        %s893 = smul.addr %s892, 8
        %s894 = scalar_lea.vmem [#allocation2], %s893
        // Predicated region
        $region73: #{tpu_custom_call.1} parent=71 // pred_check
          %p895 = pneg %p323
        $region74: #{tpu_custom_call.1} parent=71 // pred_check_branch
          %897 = sbr.rel (%p895) target = $region76
        $region75: #{tpu_custom_call.1} parent=71 // pred_region
          %s899 = ssub.s32 128, 128
          %900 = vsyncadd %s891, %s899
          %s901 = smul.addr %s27, 128
          %s902 = scalar_lea.hbm %s13, %s901
          %s904 = sshll.u32 %s894, 4
          %s905 = int_to_ptr.vmem [resolvable:$true] %s904
          %907 = dma.vmem_to_hbm [thread:$0]  %s905, 128, %s902, %s891
        $region76: #{tpu_custom_call.1} parent=71 // pred_fallthru
          _
      $region72: #{tpu_custom_call.1} parent=5 // pred_fallthru
        _
      %p908 = scmp.le.s32.totalorder 2, %s22
      // Predicated region
      $region77: #{tpu_custom_call.1} parent=5 // pred_check
        %p909 = pneg %p908
      $region78: #{tpu_custom_call.1} parent=5 // pred_check_branch
        %911 = sbr.rel (%p909) target = $region80
      $region79: #{tpu_custom_call.1} parent=5 // pred_region
        %s912 = ssub.s32 %s22, 2
        // Predicated region
        $region81: #{tpu_custom_call.1} parent=79 // pred_check
          %p913 = pneg %p329
        $region82: #{tpu_custom_call.1} parent=79 // pred_check_branch
          %915 = sbr.rel (%p913) target = $region84
        $region83: #{tpu_custom_call.1} parent=79 // pred_region
          %s916 = sand.u32 %s314, 1
          %s917 = scalar_lea.sflag [#allocation3], %s916
          %s918 = sand.u32 %s314, 1
          %s919 = smul.addr %s918, 8
          %s920 = scalar_lea.vmem [#allocation2], %s919
          %921 = dma.done %s917, 128
        $region84: #{tpu_custom_call.1} parent=79 // pred_fallthru
          _
      $region80: #{tpu_custom_call.1} parent=5 // pred_fallthru
        _
    $region6: #{tpu_custom_call.1} parent=1 // loop_footer
      %s26 = sadd.s32 1, %s22
    $region7: #{tpu_custom_call.1} parent=1 // loop_footer_branch
      %21 = sbr.rel target = $region3
    $region8: #{tpu_custom_call.1} parent=1 // loop_exit
      _
    %922 = vsyncpa [#allocation3], 1
    %s923 = scalar_lea.sflag [#allocation3], 1
    %924 = vsyncpa %s923, 1

</llo_original>
